<compile_context>
chip_gen: v5e
topology: v5e:2x2
jax: 0.10.0
libtpu: 0.0.40
codegen_flags: <defaults>
</compile_context>

<pallas_src>
import math

import jax
import jax.numpy as jnp
from jax.experimental import pallas as pl
from jax.experimental.pallas import tpu as pltpu

_SQRT_2_OVER_PI = math.sqrt(2.0 / math.pi)


def _gelu_kernel(x_ref, o_ref):
    x = x_ref[...].astype(jnp.float32)
    inner = jnp.float32(_SQRT_2_OVER_PI) * (x + jnp.float32(0.044715) * x * x * x)
    y = jnp.float32(0.5) * x * (jnp.float32(1.0) + jnp.tanh(inner))
    o_ref[...] = y.astype(o_ref.dtype)


def _choose_layout(total, last_dim):
    """Pick a lane-dense (rows, lane) slab: lane a large multiple of 128."""
    for lane in (4096, 2048, 1024, 512, 256, 128):
        if total % lane == 0:
            return total // lane, lane
    # Fallback: keep the original trailing dim as the lane axis.
    return total // last_dim, last_dim


def _choose_block_rows(rows, lane, itemsize, target_block_bytes):
    """Byte-targeted, sublane-aligned row-block; avoid a 1-step grid if possible."""
    # Sublane packing for the dtype: 8 rows (f32), 16 (bf16/f16), 32 (int8/fp8).
    sub = max(1, 4 // itemsize) * 8
    tm = max(1, target_block_bytes // (lane * itemsize))
    if tm >= sub:
        tm = (tm // sub) * sub
    tm = min(tm, rows)
    # Block dims must be a multiple of the sublane pack or equal the full extent.
    if tm != rows and tm % sub != 0:
        tm = min(rows, ((tm + sub - 1) // sub) * sub)
    # Megacore (v7x: 2 TensorCores): split the row axis into >=2 legal blocks
    # instead of letting one block swallow the whole array.
    if tm == rows and rows >= 2 * sub:
        half = max(sub, ((rows + 2 * sub - 1) // (2 * sub)) * sub)
        if half < rows:
            tm = half
    return tm


def gelu(x, *, target_block_bytes=4 << 20):
    """Tanh-approx GELU, matching the PyTorch reference formula exactly."""
    orig_shape = x.shape
    total = x.size
    if total == 0:
        return x
    last_dim = orig_shape[-1] if len(orig_shape) > 0 else 1
    itemsize = jnp.dtype(x.dtype).itemsize

    rows, lane = _choose_layout(total, last_dim)
    x2d = x.reshape(rows, lane)

    tm = _choose_block_rows(rows, lane, itemsize, target_block_bytes)
    grid = (pl.cdiv(rows, tm),)

    out = pl.pallas_call(
        _gelu_kernel,
        out_shape=jax.ShapeDtypeStruct((rows, lane), x.dtype),
        grid_spec=pltpu.PrefetchScalarGridSpec(
            num_scalar_prefetch=0,
            grid=grid,
            in_specs=[pl.BlockSpec((tm, lane), lambda i: (i, 0))],
            out_specs=pl.BlockSpec((tm, lane), lambda i: (i, 0)),
        ),
        compiler_params=pltpu.CompilerParams(
            dimension_semantics=("parallel",),
            vmem_limit_bytes=32 << 20,
        ),
    )(x2d)
    return out.reshape(orig_shape)


def _gelu_ref(x):
    c = jnp.sqrt(jnp.float32(2.0 / jnp.pi))
    return 0.5 * x * (1.0 + jnp.tanh(c * (x + 0.044715 * jnp.power(x, 3))))


if __name__ == "__main__":
    key = jax.random.PRNGKey(0)

    # Small transformer-activation shape: (batch, seq, hidden).
    x_small = jax.random.normal(key, (2, 8, 32), dtype=jnp.float32)
    y_small = gelu(x_small)
    jax.block_until_ready(y_small)
    assert jnp.allclose(y_small, _gelu_ref(x_small), atol=1e-6, rtol=1e-6), \
        "mismatch vs reference (small)"

    # Slightly larger shape exercising the lane-dense slab + multi-step grid path.
    key2 = jax.random.PRNGKey(1)
    x_big = jax.random.normal(key2, (4, 128, 512), dtype=jnp.float32)
    y_big = gelu(x_big)
    jax.block_until_ready(y_big)
    assert jnp.allclose(y_big, _gelu_ref(x_big), atol=1e-6, rtol=1e-6), \
        "mismatch vs reference (big)"

    print("KERNEL_OK")
</pallas_src>

<mosaic_0001>
module attributes {stable_mosaic.version = 11 : i64} {
  func.func @_gelu_kernel(%arg0: i32, %arg1: memref<1x512xf32, #tpu.memory_space<vmem>>, %arg2: memref<1x512xf32, #tpu.memory_space<vmem>>) attributes {dimension_semantics = [#tpu.dimension_semantics<parallel>], iteration_bounds = array<i64: 1>, scalar_prefetch = 0 : i64, scratch_operands = 0 : i64, tpu.core_type = #tpu.core_type<tc>, window_params = [{transform_indices = @transform_0, window_bounds = array<i64: 1, 512>}, {transform_indices = @transform_1, window_bounds = array<i64: 1, 512>}]} {
    %c0 = arith.constant 0 : index
    %c0_0 = arith.constant 0 : index
    %0 = vector.load %arg1[%c0, %c0_0] : memref<1x512xf32, #tpu.memory_space<vmem>>, vector<1x512xf32>
    %cst = arith.constant 4.471500e-02 : f32
    %1 = vector.broadcast %cst : f32 to vector<1x512xf32>
    %2 = arith.mulf %1, %0 : vector<1x512xf32>
    %3 = arith.mulf %2, %0 : vector<1x512xf32>
    %4 = arith.mulf %3, %0 : vector<1x512xf32>
    %5 = arith.addf %0, %4 : vector<1x512xf32>
    %cst_1 = arith.constant 0.797884583 : f32
    %6 = vector.broadcast %cst_1 : f32 to vector<1x512xf32>
    %7 = arith.mulf %6, %5 : vector<1x512xf32>
    %cst_2 = arith.constant 5.000000e-01 : f32
    %8 = vector.broadcast %cst_2 : f32 to vector<1x512xf32>
    %9 = arith.mulf %8, %0 : vector<1x512xf32>
    %10 = math.tanh %7 : vector<1x512xf32>
    %cst_3 = arith.constant 1.000000e+00 : f32
    %11 = vector.broadcast %cst_3 : f32 to vector<1x512xf32>
    %12 = arith.addf %11, %10 : vector<1x512xf32>
    %13 = arith.mulf %9, %12 : vector<1x512xf32>
    %c0_4 = arith.constant 0 : index
    %c0_5 = arith.constant 0 : index
    %14 = vector.load %arg2[%c0_4, %c0_5] : memref<1x512xf32, #tpu.memory_space<vmem>>, vector<1x512xf32>
    tpu.vector_store %arg2[%c0_4, %c0_5], %13 {strides = array<i32>} : memref<1x512xf32, #tpu.memory_space<vmem>>, vector<1x512xf32>,
    return
  }
  func.func @transform_0(%arg0: i32) -> (i32, i32) {
    %c0_i32 = arith.constant 0 : i32
    %c0_i32_0 = arith.constant 0 : i32
    return %arg0, %c0_i32 : i32, i32
  }
  func.func @transform_1(%arg0: i32) -> (i32, i32) {
    %c0_i32 = arith.constant 0 : i32
    %c0_i32_0 = arith.constant 0 : i32
    return %arg0, %c0_i32 : i32, i32
  }
}

</mosaic_0001>

<llo_original>
// kernel: tpu_custom_call.1
$region0: #{tpu_custom_call.1}
  #allocation0 [shape = 'u32[]', space=smem, size = 0x4, offset = 0x4, fixed_abs, tag = 'smem constant byte address 0x4 - core index']
  #allocation1 [shape = 'u32[72,128]{1,0:T(1,128)}', space=vmem, size = 0x9000, scoped, tag = 'internal scratch']
  %s0 = inlined_call_operand.hbm [shape: f32[1,512], index: 0, kind: input, shape index: {}]
  %s1 = inlined_call_operand.hbm [shape: f32[1,512], index: 1, kind: output, shape index: {}]
  %s2 = sld [smem:[#allocation0]]
  $region18: #{tpu_custom_call.1} parent=0
    _
  %s4 = ssub.s32 1, %s2
  %s5 = scalar_select 0, %s4, %s2
  $region1: #{tpu_custom_call.1} parent=0
    #allocation2 [shape = 'u8[2048]{0}', space=vmem, size = 0x800, scoped, tag = 'input window, operand 0, single buffered']
    #allocation3 [shape = 's32[1]{0}', space=sflag, size = 0x4, scoped, tag = 'scoped memory for tpu_custom_call.1']
    #allocation4 [shape = 's32[1]{0}', space=sflag, size = 0x4, scoped, tag = 'scoped memory for tpu_custom_call.1']
    #allocation5 [shape = 'u8[2048]{0}', space=vmem, size = 0x800, scoped, tag = 'output window, operand 0, single buffered']
    %6 = vsyncpa [#allocation3], 0
    %7 = vsyncpa [#allocation4], 0
    // Predicated region
    $region2: #{tpu_custom_call.1} parent=1 // pred_check
      _
    $region3: #{tpu_custom_call.1} parent=1 // pred_check_branch
      %9 = sbr.rel (0) target = $region5
    $region4: #{tpu_custom_call.1} parent=1 // pred_region
      %11 = vsyncadd [#allocation3], 0
      %s13 = sshll.u32 %s0, 4
      %s14 = int_to_ptr.hbm [resolvable:$true] %s13
      %s15 = sshll.u32 [#allocation2], 4
      %s16 = int_to_ptr.vmem [resolvable:$true] %s15
      %18 = dma.hbm_to_vmem [thread:$0]  %s14, 64, %s16, [#allocation3]
    $region5: #{tpu_custom_call.1} parent=1 // pred_fallthru
      _
    // Predicated region
    $region6: #{tpu_custom_call.1} parent=1 // pred_check
      _
    $region7: #{tpu_custom_call.1} parent=1 // pred_check_branch
      %20 = sbr.rel (0) target = $region9
    $region8: #{tpu_custom_call.1} parent=1 // pred_region
      %22 = dma.done [#allocation3], 64
    $region9: #{tpu_custom_call.1} parent=1 // pred_fallthru
      _
    %v23 = vld [vmem:[#allocation2] sm:$0xf]
    %v24 = vmul.f32 %v23, 0.044715
    %v25 = vmul.f32 %v24, %v23
    %v26 = vmul.f32 %v25, %v23
    %v27 = vadd.f32 %v23, %v26
    %v28 = vmul.f32 %v27, 0.7978846
    %v29 = vmul.f32 %v23, 0.5
    %v30 = vtanh.pop %v28
    %v31 = vadd.f32 %v30, 1.0
    %v32 = vmul.f32 %v29, %v31
    %v33 = vlaneseq
    %vm34 = vcmp.ge.s32.totalorder %v33, 0
    %vm35 = vcmp.lt.s32.totalorder %v33, 512
    %vm36 = vmand %vm34, %vm35
    %37 = vst.msk [vmem:[#allocation5] sm:$0xf] %vm36, %v32
    // Predicated region
    $region10: #{tpu_custom_call.1} parent=1 // pred_check
      _
    $region11: #{tpu_custom_call.1} parent=1 // pred_check_branch
      %39 = sbr.rel (0) target = $region13
    $region12: #{tpu_custom_call.1} parent=1 // pred_region
      %41 = vsyncadd [#allocation4], 0
      %s43 = sshll.u32 [#allocation5], 4
      %s44 = int_to_ptr.vmem [resolvable:$true] %s43
      %s45 = sshll.u32 %s1, 4
      %s46 = int_to_ptr.hbm [resolvable:$true] %s45
      %48 = dma.vmem_to_hbm [thread:$0]  %s44, 64, %s46, [#allocation4]
    $region13: #{tpu_custom_call.1} parent=1 // pred_fallthru
      _
    // Predicated region
    $region14: #{tpu_custom_call.1} parent=1 // pred_check
      _
    $region15: #{tpu_custom_call.1} parent=1 // pred_check_branch
      %50 = sbr.rel (0) target = $region17
    $region16: #{tpu_custom_call.1} parent=1 // pred_region
      %52 = dma.done [#allocation4], 64
    $region17: #{tpu_custom_call.1} parent=1 // pred_fallthru
      _
    %53 = vsyncpa [#allocation3], 1
    %54 = vsyncpa [#allocation4], 1

</llo_original>
